<compile_context>
chip_gen: v5e
topology: v5e:2x2
jax: 0.10.0
libtpu: 0.0.40
codegen_flags: <defaults>
</compile_context>

<pallas_src>
import functools

import jax
import jax.numpy as jnp
from jax.experimental import pallas as pl
from jax.experimental.pallas import tpu as pltpu


def _round_up(x: int, m: int) -> int:
    return (x + m - 1) // m * m


# ------------------------------ Pallas kernel ------------------------------

def _focal_loss_kernel(x_ref, t_ref, loss_ref, mean_ref, acc_ref,
                       *, alpha, gamma, n_valid, tm):
    # x_ref:    [tm, C]  f32 logits tile
    # t_ref:    [tm, 1]  int32 target class per row
    # loss_ref: [tm, 1]  f32 per-sample focal loss (output)
    # mean_ref: [1, 1]   f32 mean focal loss (output, written at last step)
    # acc_ref:  [tm, 1]  f32 persistent accumulator scratch
    i = pl.program_id(0)

    @pl.when(i == 0)
    def _():
        acc_ref[...] = jnp.zeros_like(acc_ref)

    x = x_ref[...]                                      # [tm, C] f32
    t = t_ref[...]                                      # [tm, 1] int32
    C = x.shape[-1]

    # --- per-row cross entropy (numerically stable log-softmax) ---
    m = jnp.max(x, axis=-1, keepdims=True)              # [tm, 1]
    ex = jnp.exp(x - m)
    lse = m + jnp.log(jnp.sum(ex, axis=-1, keepdims=True))     # [tm, 1]

    # gather logit of the target class via a one-hot select (no scalar gather)
    cls = jax.lax.broadcasted_iota(jnp.int32, (tm, C), 1)       # [tm, C]
    tgt_logit = jnp.sum(jnp.where(cls == t, x, 0.0),
                        axis=-1, keepdims=True)                 # [tm, 1]

    bce = lse - tgt_logit                                # [tm, 1]
    pt = jnp.exp(-bce)                                   # softmax prob of target
    f_loss = alpha * (1.0 - pt) ** gamma * bce           # focal loss per row

    # mask out padded rows (global row index >= n_valid)
    rows = i * tm + jax.lax.broadcasted_iota(jnp.int32, (tm, 1), 0)
    f_loss = jnp.where(rows < n_valid, f_loss, 0.0)

    loss_ref[...] = f_loss
    acc_ref[...] += f_loss

    @pl.when(i == pl.num_programs(0) - 1)
    def _():
        mean_ref[...] = jnp.sum(acc_ref[...], keepdims=True) * (1.0 / n_valid)


# -------------------------------- wrapper ----------------------------------

def focal_loss(logits, targets, alpha=1, gamma=2, reduce=True):
    """Equivalent of FocalLoss.forward(inputs, targets)."""
    N, C = logits.shape

    # Row tile: multiple of 8 (sublane-legal); 128 rows per step for large N.
    tm = 128 if N >= 128 else _round_up(max(N, 1), 8)
    Np = _round_up(N, tm)

    x = logits.astype(jnp.float32)
    t = targets.astype(jnp.int32).reshape(N, 1)
    if Np != N:
        x = jnp.pad(x, ((0, Np - N), (0, 0)))
        t = jnp.pad(t, ((0, Np - N), (0, 0)))

    kernel = functools.partial(_focal_loss_kernel,
                               alpha=float(alpha), gamma=gamma,
                               n_valid=N, tm=tm)

    losses, mean = pl.pallas_call(
        kernel,
        out_shape=(jax.ShapeDtypeStruct((Np, 1), jnp.float32),
                   jax.ShapeDtypeStruct((1, 1), jnp.float32)),
        grid_spec=pltpu.PrefetchScalarGridSpec(
            num_scalar_prefetch=0,
            grid=(Np // tm,),
            in_specs=[pl.BlockSpec((tm, C), lambda i: (i, 0)),
                      pl.BlockSpec((tm, 1), lambda i: (i, 0))],
            out_specs=[pl.BlockSpec((tm, 1), lambda i: (i, 0)),
                       pl.BlockSpec((1, 1), lambda i: (0, 0))],
            scratch_shapes=[pltpu.VMEM((tm, 1), jnp.float32)]),
        compiler_params=pltpu.CompilerParams(
            # running-mean accumulator lives across the grid -> serial axis
            dimension_semantics=("arbitrary",)),
    )(x, t)

    if reduce:
        return mean[0, 0]
    return losses[:N, 0]


# ------------------------------ pure-JAX ref --------------------------------

def _focal_loss_ref(logits, targets, alpha, gamma):
    logp = jax.nn.log_softmax(logits.astype(jnp.float32), axis=-1)
    ce = -jnp.take_along_axis(logp, targets[:, None], axis=-1)[:, 0]
    pt = jnp.exp(-ce)
    return alpha * (1.0 - pt) ** gamma * ce


# ---------------------------------- main ------------------------------------

if __name__ == "__main__":
    key = jax.random.PRNGKey(0)
    k1, k2 = jax.random.split(key)

    # NLI-style shapes: batch of 10 samples, 3 classes (exercises row padding
    # to the 8-aligned tile and the in-kernel valid-row mask).
    N, C = 10, 3
    logits = jax.random.normal(k1, (N, C), dtype=jnp.float32)
    targets = jax.random.randint(k2, (N,), 0, C, dtype=jnp.int32)

    loss_mean = focal_loss(logits, targets, alpha=1, gamma=2, reduce=True)
    loss_vec = focal_loss(logits, targets, alpha=1, gamma=2, reduce=False)
    loss_mean, loss_vec = jax.block_until_ready((loss_mean, loss_vec))

    ref_vec = _focal_loss_ref(logits, targets, 1.0, 2)
    assert loss_vec.shape == (N,)
    assert bool(jnp.all(jnp.isfinite(loss_vec)))
    assert bool(jnp.isfinite(loss_mean))
    assert jnp.allclose(loss_vec, ref_vec, atol=1e-5, rtol=1e-5)
    assert jnp.allclose(loss_mean, jnp.mean(ref_vec), atol=1e-5, rtol=1e-5)

    print("KERNEL_OK")
</pallas_src>

<mosaic_0001>
module attributes {stable_mosaic.version = 11 : i64} {
  func.func @_focal_loss_kernel(%arg0: i32, %arg1: memref<16x3xf32, #tpu.memory_space<vmem>>, %arg2: memref<16x1xi32, #tpu.memory_space<vmem>>, %arg3: memref<16x1xf32, #tpu.memory_space<vmem>>, %arg4: memref<1x1xf32, #tpu.memory_space<vmem>>, %arg5: memref<16x1xf32, #tpu.memory_space<vmem>>) attributes {dimension_semantics = [#tpu.dimension_semantics<arbitrary>], iteration_bounds = array<i64: 1>, scalar_prefetch = 0 : i64, scratch_operands = 1 : i64, tpu.core_type = #tpu.core_type<tc>, window_params = [{transform_indices = @transform_0, window_bounds = array<i64: 16, 3>}, {transform_indices = @transform_1, window_bounds = array<i64: 16, 1>}, {transform_indices = @transform_2, window_bounds = array<i64: 16, 1>}, {pipeline_mode = #tpu.pipeline_mode<synchronous>, transform_indices = @transform_3, window_bounds = array<i64: 1, 1>}]} {
    %c0_i32 = arith.constant 0 : i32
    %0 = arith.cmpi eq, %arg0, %c0_i32 : i32
    %1 = arith.extui %0 : i1 to i32
    %c0_i32_0 = arith.constant 0 : i32
    %2 = arith.cmpi ne, %1, %c0_i32_0 : i32
    scf.if %2 {
      %cst_19 = arith.constant 0.000000e+00 : f32
      %46 = vector.broadcast %cst_19 : f32 to vector<16x1xf32>
      %c0_20 = arith.constant 0 : index
      %c0_21 = arith.constant 0 : index
      %47 = vector.load %arg5[%c0_20, %c0_21] : memref<16x1xf32, #tpu.memory_space<vmem>>, vector<16x1xf32>
      tpu.vector_store %arg5[%c0_20, %c0_21], %46 {strides = array<i32>} : memref<16x1xf32, #tpu.memory_space<vmem>>, vector<16x1xf32>,
    } else {
    }
    %c0 = arith.constant 0 : index
    %c0_1 = arith.constant 0 : index
    %3 = vector.load %arg1[%c0, %c0_1] : memref<16x3xf32, #tpu.memory_space<vmem>>, vector<16x3xf32>
    %c0_2 = arith.constant 0 : index
    %c0_3 = arith.constant 0 : index
    %4 = vector.load %arg2[%c0_2, %c0_3] : memref<16x1xi32, #tpu.memory_space<vmem>>, vector<16x1xi32>
    %cst = arith.constant dense<0xFF800000> : vector<16xf32>
    %5 = vector.multi_reduction <maximumf>, %3, %cst [1] : vector<16x3xf32> to vector<16xf32>
    %6 = vector.shape_cast %5 : vector<16xf32> to vector<16x1xf32>
    %7 = vector.broadcast %6 : vector<16x1xf32> to vector<16x3xf32>
    %8 = arith.subf %3, %7 : vector<16x3xf32>
    %9 = math.exp %8 : vector<16x3xf32>
    %cst_4 = arith.constant dense<0.000000e+00> : vector<16xf32>
    %10 = vector.multi_reduction <add>, %9, %cst_4 [1] : vector<16x3xf32> to vector<16xf32>
    %11 = vector.shape_cast %10 : vector<16xf32> to vector<16x1xf32>
    %12 = math.log %11 : vector<16x1xf32>
    %13 = arith.addf %6, %12 : vector<16x1xf32>
    %14 = tpu.iota {dimensions = array<i32: 1>} : vector<16x3xi32>
    %15 = vector.broadcast %4 : vector<16x1xi32> to vector<16x3xi32>
    %16 = arith.cmpi eq, %14, %15 : vector<16x3xi32>
    %cst_5 = arith.constant 0.000000e+00 : f32
    %17 = vector.broadcast %cst_5 : f32 to vector<16x3xf32>
    %18 = arith.select %16, %3, %17 : vector<16x3xi1>, vector<16x3xf32>
    %cst_6 = arith.constant dense<0.000000e+00> : vector<16xf32>
    %19 = vector.multi_reduction <add>, %18, %cst_6 [1] : vector<16x3xf32> to vector<16xf32>
    %20 = vector.shape_cast %19 : vector<16xf32> to vector<16x1xf32>
    %21 = arith.subf %13, %20 : vector<16x1xf32>
    %cst_7 = arith.constant 0.000000e+00 : f32
    %22 = vector.broadcast %cst_7 : f32 to vector<16x1xf32>
    %23 = arith.subf %22, %21 : vector<16x1xf32>
    %24 = math.exp %23 : vector<16x1xf32>
    %cst_8 = arith.constant 1.000000e+00 : f32
    %25 = vector.broadcast %cst_8 : f32 to vector<16x1xf32>
    %26 = arith.subf %25, %24 : vector<16x1xf32>
    %27 = arith.mulf %26, %26 : vector<16x1xf32>
    %cst_9 = arith.constant 1.000000e+00 : f32
    %28 = vector.broadcast %cst_9 : f32 to vector<16x1xf32>
    %29 = arith.mulf %28, %27 : vector<16x1xf32>
    %30 = arith.mulf %29, %21 : vector<16x1xf32>
    %c16_i32 = arith.constant 16 : i32
    %31 = arith.muli %arg0, %c16_i32 : i32
    %32 = tpu.iota {dimensions = array<i32: 0>} : vector<16x1xi32>
    %33 = vector.broadcast %31 : i32 to vector<16x1xi32>
    %34 = arith.addi %33, %32 : vector<16x1xi32>
    %c10_i32 = arith.constant 10 : i32
    %35 = vector.broadcast %c10_i32 : i32 to vector<16x1xi32>
    %36 = arith.cmpi slt, %34, %35 : vector<16x1xi32>
    %cst_10 = arith.constant 0.000000e+00 : f32
    %37 = vector.broadcast %cst_10 : f32 to vector<16x1xf32>
    %38 = arith.select %36, %30, %37 : vector<16x1xi1>, vector<16x1xf32>
    %c0_11 = arith.constant 0 : index
    %c0_12 = arith.constant 0 : index
    %39 = vector.load %arg3[%c0_11, %c0_12] : memref<16x1xf32, #tpu.memory_space<vmem>>, vector<16x1xf32>
    tpu.vector_store %arg3[%c0_11, %c0_12], %38 {strides = array<i32>} : memref<16x1xf32, #tpu.memory_space<vmem>>, vector<16x1xf32>,
    %c0_13 = arith.constant 0 : index
    %c0_14 = arith.constant 0 : index
    %40 = vector.load %arg5[%c0_13, %c0_14] : memref<16x1xf32, #tpu.memory_space<vmem>>, vector<16x1xf32>
    %41 = arith.addf %40, %38 : vector<16x1xf32>
    %c0_15 = arith.constant 0 : index
    %c0_16 = arith.constant 0 : index
    %42 = vector.load %arg5[%c0_15, %c0_16] : memref<16x1xf32, #tpu.memory_space<vmem>>, vector<16x1xf32>
    tpu.vector_store %arg5[%c0_15, %c0_16], %41 {strides = array<i32>} : memref<16x1xf32, #tpu.memory_space<vmem>>, vector<16x1xf32>,
    %c0_i32_17 = arith.constant 0 : i32
    %43 = arith.cmpi eq, %arg0, %c0_i32_17 : i32
    %44 = arith.extui %43 : i1 to i32
    %c0_i32_18 = arith.constant 0 : i32
    %45 = arith.cmpi ne, %44, %c0_i32_18 : i32
    scf.if %45 {
      %c0_19 = arith.constant 0 : index
      %c0_20 = arith.constant 0 : index
      %46 = vector.load %arg5[%c0_19, %c0_20] : memref<16x1xf32, #tpu.memory_space<vmem>>, vector<16x1xf32>
      %47 = vector.shape_cast %46 : vector<16x1xf32> to vector<1x16x1xf32>
      %cst_21 = arith.constant dense<0.000000e+00> : vector<1xf32>
      %48 = vector.multi_reduction <add>, %47, %cst_21 [1, 2] : vector<1x16x1xf32> to vector<1xf32>
      %49 = vector.shape_cast %48 : vector<1xf32> to vector<1x1x1xf32>
      %50 = vector.extract %49[0, 0, 0] : f32 from vector<1x1x1xf32>
      %51 = vector.broadcast %50 : f32 to vector<1x1xf32>
      %cst_22 = arith.constant 1.000000e-01 : f32
      %52 = vector.broadcast %cst_22 : f32 to vector<1x1xf32>
      %53 = arith.mulf %51, %52 : vector<1x1xf32>
      %c0_23 = arith.constant 0 : index
      %c0_24 = arith.constant 0 : index
      %54 = vector.load %arg4[%c0_23, %c0_24] : memref<1x1xf32, #tpu.memory_space<vmem>>, vector<1x1xf32>
      tpu.vector_store %arg4[%c0_23, %c0_24], %53 {strides = array<i32>} : memref<1x1xf32, #tpu.memory_space<vmem>>, vector<1x1xf32>,
    } else {
    }
    return
  }
  func.func @transform_0(%arg0: i32) -> (i32, i32) {
    %c0_i32 = arith.constant 0 : i32
    %c0_i32_0 = arith.constant 0 : i32
    return %arg0, %c0_i32 : i32, i32
  }
  func.func @transform_1(%arg0: i32) -> (i32, i32) {
    %c0_i32 = arith.constant 0 : i32
    %c0_i32_0 = arith.constant 0 : i32
    return %arg0, %c0_i32 : i32, i32
  }
  func.func @transform_2(%arg0: i32) -> (i32, i32) {
    %c0_i32 = arith.constant 0 : i32
    %c0_i32_0 = arith.constant 0 : i32
    return %arg0, %c0_i32 : i32, i32
  }
  func.func @transform_3(%arg0: i32) -> (i32, i32) {
    %c0_i32 = arith.constant 0 : i32
    %c0_i32_0 = arith.constant 0 : i32
    %c0_i32_1 = arith.constant 0 : i32
    return %c0_i32, %c0_i32_0 : i32, i32
  }
}

</mosaic_0001>

<llo_original>
// kernel: tpu_custom_call.1
$region0: #{tpu_custom_call.1}
  #allocation0 [shape = 'u32[]', space=smem, size = 0x4, offset = 0x4, fixed_abs, tag = 'smem constant byte address 0x4 - core index']
  #allocation1 [shape = 'u32[72,128]{1,0:T(1,128)}', space=vmem, size = 0x9000, scoped, tag = 'internal scratch']
  #allocation2 [shape = 'f32[16,1]{1,0:T(8,128)}', space=vmem, size = 0x2000, scoped, tag = 'scratch operand']
  %s0 = inlined_call_operand.vmem [shape: f32[16,3], index: 0, kind: input, shape index: {}]
  %s1 = inlined_call_operand.vmem [shape: s32[16,1], index: 1, kind: input, shape index: {}]
  %s2 = inlined_call_operand.vmem [shape: f32[16,1], index: 2, kind: output, shape index: {0}]
  %s3 = inlined_call_operand.hbm [shape: f32[1,1], index: 3, kind: output, shape index: {1}]
  %4 = xla_tuple %s2, %s3
  %s5 = sld [smem:[#allocation0]]
  $region34: #{tpu_custom_call.1} parent=0
    _
  %s7 = ssub.s32 1, %s5
  %s8 = scalar_select 0, %s7, %s5
  $region1: #{tpu_custom_call.1} parent=0
    #allocation3 [shape = 'u8[512]{0}', space=vmem, size = 0x400, scoped, tag = 'output window, operand 1, single buffered']
    #allocation4 [shape = 's32[1]{0}', space=sflag, size = 0x4, scoped, tag = 'scoped memory for tpu_custom_call.1']
    %9 = vsyncpa [#allocation4], 0
    // Predicated region
    $region2: #{tpu_custom_call.1} parent=1 // pred_check
      _
    $region3: #{tpu_custom_call.1} parent=1 // pred_check_branch
      %11 = sbr.rel (0) target = $region5
    $region4: #{tpu_custom_call.1} parent=1 // pred_region
      _
    $region5: #{tpu_custom_call.1} parent=1 // pred_fallthru
      _
    // Predicated region
    $region6: #{tpu_custom_call.1} parent=1 // pred_check
      _
    $region7: #{tpu_custom_call.1} parent=1 // pred_check_branch
      %13 = sbr.rel (0) target = $region9
    $region8: #{tpu_custom_call.1} parent=1 // pred_region
      _
    $region9: #{tpu_custom_call.1} parent=1 // pred_fallthru
      _
    %p14 = scmp.eq.s32.totalorder 0, 0
    // Predicated region
    $region10: #{tpu_custom_call.1} parent=1 // pred_check
      %p15 = pneg %p14
    $region11: #{tpu_custom_call.1} parent=1 // pred_check_branch
      %17 = sbr.rel (%p15) target = $region13
    $region12: #{tpu_custom_call.1} parent=1 // pred_region
      %vm18 = vcmask 7168
      %19 = vst.msk [vmem:[#allocation2] sm:$0xff] %vm18, 0.0
      %20 = vst.msk [vmem:[#allocation2 + $0x8] sm:$0xff] %vm18, 0.0
    $region13: #{tpu_custom_call.1} parent=1 // pred_fallthru
      _
    %v21 = vld [vmem:[%s0] sm:$0xff]
    %v22 = vld [vmem:[%s0 + $0x8] sm:$0xff]
    %v23 = vld [vmem:[%s1] sm:$0xff]
    %v24 = vld [vmem:[%s1 + $0x8] sm:$0xff]
    %vm25 = vcmask 23552
    %v26 = vsel %vm25, %v21, -inf
    %27 = vmax.xlane.f32.xlu0 %v26
    %v28 = vpop.xlane.xlu0 %27
    %v29 = vsel %vm25, %v22, -inf
    %30 = vmax.xlane.f32.xlu0 %v29
    %v31 = vpop.xlane.xlu0 %30
    %v32 = vsub.f32 %v21, %v28
    %v33 = vsub.f32 %v22, %v31
    %v34 = vmul.f32 %v32, 1.442695
    %v35 = vpow.pop %v34
    %v36 = vmul.f32 %v33, 1.442695
    %v37 = vpow.pop %v36
    %v38 = vsel %vm25, %v35, 0.0
    %39 = vadd.xlane.f32.xlu0 %v38
    %v40 = vpop.xlane.xlu0 %39
    %v41 = vsel %vm25, %v37, 0.0
    %42 = vadd.xlane.f32.xlu0 %v41
    %v43 = vpop.xlane.xlu0 %42
    %v44 = vlog2.pop %v40
    %v45 = vmul.f32 %v44, 0.6931472
    %v46 = vlog2.pop %v43
    %v47 = vmul.f32 %v46, 0.6931472
    %v48 = vadd.f32 %v28, %v45
    %v49 = vadd.f32 %v31, %v47
    %v50 = vlaneseq
    %v51 = vand.u32 %v50, 127
    %52 = vset.pattern.permute.xlu0 0
    %53 = vperm.xlu0 %52, %v23
    %v54 = vpop.permute.xlu0 %53
    %55 = vset.pattern.permute.xlu0 0
    %56 = vperm.xlu0 %55, %v24
    %v57 = vpop.permute.xlu0 %56
    %vm58 = vcmp.eq.s32.totalorder %v51, %v54
    %vm59 = vcmp.eq.s32.totalorder %v51, %v57
    %v60 = vsel %vm58, %v21, 0.0
    %v61 = vsel %vm59, %v22, 0.0
    %v62 = vsel %vm25, %v60, 0.0
    %63 = vadd.xlane.f32.xlu0 %v62
    %v64 = vpop.xlane.xlu0 %63
    %v65 = vsel %vm25, %v61, 0.0
    %66 = vadd.xlane.f32.xlu0 %v65
    %v67 = vpop.xlane.xlu0 %66
    %v68 = vsub.f32 %v48, %v64
    %v69 = vsub.f32 %v49, %v67
    %v70 = vsub.f32 0.0, %v68
    %v71 = vsub.f32 0.0, %v69
    %v72 = vmul.f32 %v70, 1.442695
    %v73 = vpow.pop %v72
    %v74 = vmul.f32 %v71, 1.442695
    %v75 = vpow.pop %v74
    %v76 = vsub.f32 1.0, %v73
    %v77 = vsub.f32 1.0, %v75
    %v78 = vmul.f32 %v76, %v76
    %v79 = vmul.f32 %v77, %v77
    %v80 = vmul.f32 %v78, %v68
    %v81 = vmul.f32 %v79, %v69
    %s82 = smul.u32 0, 16
    %v83 = vlaneseq
    %v84 = vshrl.u32 %v83, 7
    %v85 = vadd.s32 %v84, 8
    %v86 = vstv %s82
    %v87 = vadd.s32 %v86, %v84
    %v88 = vadd.s32 %v86, %v85
    %vm89 = vcmp.lt.s32.totalorder %v87, 10
    %vm90 = vcmp.lt.s32.totalorder %v88, 10
    %v91 = vsel %vm89, %v80, 0.0
    %v92 = vsel %vm90, %v81, 0.0
    %vm93 = vcmask 7168
    %94 = vst.msk [vmem:[%s2] sm:$0xff] %vm93, %v91
    %95 = vst.msk [vmem:[%s2 + $0x8] sm:$0xff] %vm93, %v92
    %v96 = vld [vmem:[#allocation2] sm:$0xff]
    %v97 = vld [vmem:[#allocation2 + $0x8] sm:$0xff]
    %v98 = vadd.f32 %v96, %v91
    %v99 = vadd.f32 %v97, %v92
    %100 = vst.msk [vmem:[#allocation2] sm:$0xff] %vm93, %v98
    %101 = vst.msk [vmem:[#allocation2 + $0x8] sm:$0xff] %vm93, %v99
    // Predicated region
    $region14: #{tpu_custom_call.1} parent=1 // pred_check
      %p102 = pneg %p14
    $region15: #{tpu_custom_call.1} parent=1 // pred_check_branch
      %104 = sbr.rel (%p102) target = $region17
    $region16: #{tpu_custom_call.1} parent=1 // pred_region
      %v105 = vld [vmem:[#allocation2] sm:$0xff]
      %v106 = vld [vmem:[#allocation2 + $0x8] sm:$0xff]
      %v107 = vsel %vm93, %v105, 0.0
      %v108 = vsel %vm93, %v106, 0.0
      %v109 = vadd.f32 %v107, %v108
      %110 = vadd.xlane.f32.xlu0 %v109
      %v111 = vpop.xlane.xlu0 %110
      %v112 = vrot.slane %v111, 4
      %v113 = vadd.f32 %v111, %v112
      %v114 = vrot.slane %v113, 2
      %v115 = vadd.f32 %v113, %v114
      %v116 = vrot.slane %v115, 1
      %v117 = vadd.f32 %v115, %v116
      %s118 = vtos %v117
      %v119 = vstv %s118
      %v120 = vmul.f32 %v119, 0.1
      %vm121 = vcmask 0
      %122 = vst.msk [vmem:[#allocation3] sm:$0x1] %vm121, %v120
    $region17: #{tpu_custom_call.1} parent=1 // pred_fallthru
      _
    // Predicated region
    $region18: #{tpu_custom_call.1} parent=1 // pred_check
      _
    $region19: #{tpu_custom_call.1} parent=1 // pred_check_branch
      %124 = sbr.rel (0) target = $region21
    $region20: #{tpu_custom_call.1} parent=1 // pred_region
      _
    $region21: #{tpu_custom_call.1} parent=1 // pred_fallthru
      _
    // Predicated region
    $region22: #{tpu_custom_call.1} parent=1 // pred_check
      _
    $region23: #{tpu_custom_call.1} parent=1 // pred_check_branch
      %126 = sbr.rel (0) target = $region25
    $region24: #{tpu_custom_call.1} parent=1 // pred_region
      %128 = vsyncadd [#allocation4], 0
      %s130 = sshll.u32 [#allocation3], 4
      %s131 = int_to_ptr.vmem [resolvable:$true] %s130
      %s132 = sshll.u32 %s3, 4
      %s133 = int_to_ptr.hbm [resolvable:$true] %s132
      %135 = dma.vmem_to_hbm [thread:$0]  %s131, 16, %s133, [#allocation4]
    $region25: #{tpu_custom_call.1} parent=1 // pred_fallthru
      _
    // Predicated region
    $region26: #{tpu_custom_call.1} parent=1 // pred_check
      _
    $region27: #{tpu_custom_call.1} parent=1 // pred_check_branch
      %137 = sbr.rel (0) target = $region29
    $region28: #{tpu_custom_call.1} parent=1 // pred_region
      _
    $region29: #{tpu_custom_call.1} parent=1 // pred_fallthru
      _
    // Predicated region
    $region30: #{tpu_custom_call.1} parent=1 // pred_check
      _
    $region31: #{tpu_custom_call.1} parent=1 // pred_check_branch
      %139 = sbr.rel (0) target = $region33
    $region32: #{tpu_custom_call.1} parent=1 // pred_region
      %141 = dma.done [#allocation4], 16
    $region33: #{tpu_custom_call.1} parent=1 // pred_fallthru
      _
    %142 = vsyncpa [#allocation4], 1

</llo_original>
